<compile_context>
chip_gen: v6e
topology: v6e:2x2x1
jax: 0.10.0
libtpu: 0.0.40
codegen_flags: <defaults>
</compile_context>

<pallas_src>
import jax
import jax.numpy as jnp
from jax.experimental import pallas as pl
from jax.experimental.pallas import tpu as pltpu  # noqa: F401  (TPU backend)

VOCAB_SIZE = 100
EMBED_DIM = 32
LANE = 128          # TPU vreg lane width; pad embed dim to this for lane-dense I/O
LN_EPS = 1e-5       # PyTorch nn.LayerNorm default eps


# ---------------------------------------------------------------------------
# Fused kernel: token/segment/position embedding sum + LayerNorm
# ---------------------------------------------------------------------------
def joint_embedding_kernel(tok_ids_ref, seg_ids_ref,
                           tok_tab_ref, seg_tab_ref, pos_tab_ref,
                           gamma_ref, beta_ref, out_ref):
    """Whole batch in one block.

    tok_ids_ref / seg_ids_ref : (N, 1) int32, N = B*S (rows flattened batch-major)
    tok_tab_ref / seg_tab_ref : (V, 128) f32 (embed dim zero-padded to 128 lanes)
    pos_tab_ref               : (S, 128) f32 (rows 0..S-1 of the positional table)
    gamma_ref / beta_ref      : (1, 128) f32 (zero in the padded lanes)
    out_ref                   : (N, 128) f32 (lane-dense output)
    """
    n = out_ref.shape[0]
    v = tok_tab_ref.shape[0]
    s = pos_tab_ref.shape[0]

    tok_ids = tok_ids_ref[...]                                 # (N, 1)
    seg_ids = seg_ids_ref[...]                                 # (N, 1)

    # Embedding lookups as one-hot matmuls (MXU) — no per-row dynamic gathers,
    # no lane-dim slicing or concatenation.
    col_v = jax.lax.broadcasted_iota(jnp.int32, (n, v), 1)
    tok_oh = (col_v == tok_ids).astype(jnp.float32)            # (N, V)
    seg_oh = (col_v == seg_ids).astype(jnp.float32)            # (N, V)

    row_i = jax.lax.broadcasted_iota(jnp.int32, (n, s), 0)
    col_s = jax.lax.broadcasted_iota(jnp.int32, (n, s), 1)
    pos_oh = ((row_i % s) == col_s).astype(jnp.float32)        # (N, S): pos = row % S

    x = (jnp.dot(tok_oh, tok_tab_ref[...], preferred_element_type=jnp.float32)
         + jnp.dot(seg_oh, seg_tab_ref[...], preferred_element_type=jnp.float32)
         + jnp.dot(pos_oh, pos_tab_ref[...], preferred_element_type=jnp.float32))

    # LayerNorm over the TRUE embed dim. Padded lanes are zero in the tables,
    # so sums over the padded width equal sums over the real features; divide
    # explicitly by EMBED_DIM (biased variance, as in PyTorch LayerNorm).
    inv_d = 1.0 / EMBED_DIM
    mu = jnp.sum(x, axis=-1, keepdims=True) * inv_d
    var = jnp.sum(x * x, axis=-1, keepdims=True) * inv_d - mu * mu
    out_ref[...] = ((x - mu) * jax.lax.rsqrt(var + LN_EPS)
                    * gamma_ref[...] + beta_ref[...])


# ---------------------------------------------------------------------------
# Wrapper
# ---------------------------------------------------------------------------
def _pad_lanes(a):
    d = a.shape[-1]
    if d == LANE:
        return a
    return jnp.pad(a, [(0, 0)] * (a.ndim - 1) + [(0, LANE - d)])


@jax.jit
def joint_embedding_forward(params, input_tensor, segment_tensor=None):
    """Mirrors JointEmbedding.forward -> (B, S, EMBED_DIM)."""
    b, s = input_tensor.shape
    if segment_tensor is None:
        segment_tensor = jnp.zeros_like(input_tensor)

    n = b * s
    tok_ids = input_tensor.reshape(n, 1).astype(jnp.int32)
    seg_ids = segment_tensor.reshape(n, 1).astype(jnp.int32)

    tok_tab = _pad_lanes(params["token_embedding"])            # (V, 128)
    seg_tab = _pad_lanes(params["segment_embedding"])          # (V, 128)
    pos_tab = _pad_lanes(params["positional_emb"][:s])         # (S, 128), static slice
    gamma = _pad_lanes(params["ln_gamma"].reshape(1, -1))      # (1, 128)
    beta = _pad_lanes(params["ln_beta"].reshape(1, -1))        # (1, 128)

    # Single pallas_call, no grid: whole-array blocks resident in VMEM.
    out = pl.pallas_call(
        joint_embedding_kernel,
        out_shape=jax.ShapeDtypeStruct((n, LANE), jnp.float32),
    )(tok_ids, seg_ids, tok_tab, seg_tab, pos_tab, gamma, beta)

    return out[:, :EMBED_DIM].reshape(b, s, EMBED_DIM)


# ---------------------------------------------------------------------------
# Main
# ---------------------------------------------------------------------------
if __name__ == "__main__":
    key = jax.random.PRNGKey(0)
    k_tok, k_seg, k_pos, k_g, k_b, k_in, k_sg = jax.random.split(key, 7)

    # Parameters match the PyTorch module: all three embedding tables have
    # num_embeddings = vocab_size; LayerNorm affine over embed_dim.
    params = {
        "token_embedding": jax.random.normal(k_tok, (VOCAB_SIZE, EMBED_DIM), jnp.float32),
        "segment_embedding": jax.random.normal(k_seg, (VOCAB_SIZE, EMBED_DIM), jnp.float32),
        "positional_emb": jax.random.normal(k_pos, (VOCAB_SIZE, EMBED_DIM), jnp.float32),
        "ln_gamma": 1.0 + 0.1 * jax.random.normal(k_g, (EMBED_DIM,), jnp.float32),
        "ln_beta": 0.1 * jax.random.normal(k_b, (EMBED_DIM,), jnp.float32),
    }

    B, S = 2, 8
    input_tensor = jax.random.randint(k_in, (B, S), 0, VOCAB_SIZE, dtype=jnp.int32)
    segment_tensor = jax.random.randint(k_sg, (B, S), 0, 2, dtype=jnp.int32)

    out = joint_embedding_forward(params, input_tensor, segment_tensor)
    out = jax.block_until_ready(out)

    # Pure-JAX reference mirroring the PyTorch module.
    emb = (params["token_embedding"][input_tensor]
           + params["positional_emb"][jnp.arange(S)][None, :, :]
           + params["segment_embedding"][segment_tensor])
    mu = jnp.mean(emb, axis=-1, keepdims=True)
    var = jnp.mean((emb - mu) ** 2, axis=-1, keepdims=True)
    ref = (emb - mu) / jnp.sqrt(var + LN_EPS) * params["ln_gamma"] + params["ln_beta"]

    assert out.shape == (B, S, EMBED_DIM)
    assert bool(jnp.all(jnp.isfinite(out)))
    err = float(jnp.max(jnp.abs(out - ref)))
    assert bool(jnp.allclose(out, ref, atol=1e-4, rtol=1e-4)), f"max abs err {err}"

    print("KERNEL_OK")
</pallas_src>

<mosaic_0001>
module attributes {stable_mosaic.version = 11 : i64} {
  func.func @joint_embedding_kernel(%arg0: memref<16x1xi32, #tpu.memory_space<vmem>>, %arg1: memref<16x1xi32, #tpu.memory_space<vmem>>, %arg2: memref<100x128xf32, #tpu.memory_space<vmem>>, %arg3: memref<100x128xf32, #tpu.memory_space<vmem>>, %arg4: memref<8x128xf32, #tpu.memory_space<vmem>>, %arg5: memref<1x128xf32, #tpu.memory_space<vmem>>, %arg6: memref<1x128xf32, #tpu.memory_space<vmem>>, %arg7: memref<16x128xf32, #tpu.memory_space<vmem>>) attributes {dimension_semantics = [], scalar_prefetch = 0 : i64, scratch_operands = 0 : i64, tpu.core_type = #tpu.core_type<tc>} {
    %c0 = arith.constant 0 : index
    %c0_0 = arith.constant 0 : index
    %0 = vector.load %arg0[%c0, %c0_0] : memref<16x1xi32, #tpu.memory_space<vmem>>, vector<16x1xi32>
    %c0_1 = arith.constant 0 : index
    %c0_2 = arith.constant 0 : index
    %1 = vector.load %arg1[%c0_1, %c0_2] : memref<16x1xi32, #tpu.memory_space<vmem>>, vector<16x1xi32>
    %2 = tpu.iota {dimensions = array<i32: 1>} : vector<16x100xi32>
    %3 = vector.broadcast %0 : vector<16x1xi32> to vector<16x100xi32>
    %4 = arith.cmpi eq, %2, %3 : vector<16x100xi32>
    %5 = arith.extui %4 : vector<16x100xi1> to vector<16x100xi32>
    %6 = arith.sitofp %5 : vector<16x100xi32> to vector<16x100xf32>
    %7 = vector.broadcast %1 : vector<16x1xi32> to vector<16x100xi32>
    %8 = arith.cmpi eq, %2, %7 : vector<16x100xi32>
    %9 = arith.extui %8 : vector<16x100xi1> to vector<16x100xi32>
    %10 = arith.sitofp %9 : vector<16x100xi32> to vector<16x100xf32>
    %11 = tpu.iota {dimensions = array<i32: 0>} : vector<16x8xi32>
    %12 = tpu.iota {dimensions = array<i32: 1>} : vector<16x8xi32>
    %c8_i32 = arith.constant 8 : i32
    %c0_i32 = arith.constant 0 : i32
    %13 = arith.cmpi eq, %c8_i32, %c0_i32 : i32
    %c1_i32 = arith.constant 1 : i32
    %14 = arith.select %13, %c1_i32, %c8_i32 : i32
    %15 = vector.broadcast %14 : i32 to vector<16x8xi32>
    %16 = arith.remsi %11, %15 : vector<16x8xi32>
    %c0_i32_3 = arith.constant 0 : i32
    %17 = vector.broadcast %c0_i32_3 : i32 to vector<16x8xi32>
    %18 = arith.cmpi ne, %16, %17 : vector<16x8xi32>
    %c0_i32_4 = arith.constant 0 : i32
    %19 = vector.broadcast %c0_i32_4 : i32 to vector<16x8xi32>
    %20 = arith.cmpi slt, %16, %19 : vector<16x8xi32>
    %c0_i32_5 = arith.constant 0 : i32
    %21 = arith.cmpi slt, %14, %c0_i32_5 : i32
    %22 = vector.broadcast %21 : i1 to vector<16x8xi1>
    %23 = vector.broadcast %22 : vector<16x8xi1> to vector<16x8xi1>
    %24 = arith.xori %20, %23 : vector<16x8xi1>
    %25 = arith.andi %24, %18 : vector<16x8xi1>
    %26 = vector.broadcast %14 : i32 to vector<16x8xi32>
    %27 = arith.addi %16, %26 : vector<16x8xi32>
    %28 = arith.select %25, %27, %16 : vector<16x8xi1>, vector<16x8xi32>
    %29 = arith.cmpi eq, %28, %12 : vector<16x8xi32>
    %30 = arith.extui %29 : vector<16x8xi1> to vector<16x8xi32>
    %31 = arith.sitofp %30 : vector<16x8xi32> to vector<16x8xf32>
    %c0_6 = arith.constant 0 : index
    %c0_7 = arith.constant 0 : index
    %32 = vector.load %arg2[%c0_6, %c0_7] : memref<100x128xf32, #tpu.memory_space<vmem>>, vector<100x128xf32>
    %cst = arith.constant dense<0.000000e+00> : vector<16x128xf32>
    %33 = tpu.matmul %6, %32, %cst {dimension_numbers = #tpu.dot_dimension_numbers<[1], [0], [0], [1], [0, 0, 1, 1], [], []>} : vector<16x100xf32>, vector<100x128xf32>, vector<16x128xf32> -> vector<16x128xf32>
    %c0_8 = arith.constant 0 : index
    %c0_9 = arith.constant 0 : index
    %34 = vector.load %arg3[%c0_8, %c0_9] : memref<100x128xf32, #tpu.memory_space<vmem>>, vector<100x128xf32>
    %cst_10 = arith.constant dense<0.000000e+00> : vector<16x128xf32>
    %35 = tpu.matmul %10, %34, %cst_10 {dimension_numbers = #tpu.dot_dimension_numbers<[1], [0], [0], [1], [0, 0, 1, 1], [], []>} : vector<16x100xf32>, vector<100x128xf32>, vector<16x128xf32> -> vector<16x128xf32>
    %36 = arith.addf %33, %35 : vector<16x128xf32>
    %c0_11 = arith.constant 0 : index
    %c0_12 = arith.constant 0 : index
    %37 = vector.load %arg4[%c0_11, %c0_12] : memref<8x128xf32, #tpu.memory_space<vmem>>, vector<8x128xf32>
    %cst_13 = arith.constant dense<0.000000e+00> : vector<16x128xf32>
    %38 = tpu.matmul %31, %37, %cst_13 {dimension_numbers = #tpu.dot_dimension_numbers<[1], [0], [0], [1], [0, 0, 1, 1], [], []>} : vector<16x8xf32>, vector<8x128xf32>, vector<16x128xf32> -> vector<16x128xf32>
    %39 = arith.addf %36, %38 : vector<16x128xf32>
    %cst_14 = arith.constant dense<0.000000e+00> : vector<16xf32>
    %40 = vector.multi_reduction <add>, %39, %cst_14 [1] : vector<16x128xf32> to vector<16xf32>
    %41 = vector.shape_cast %40 : vector<16xf32> to vector<16x1xf32>
    %cst_15 = arith.constant 3.125000e-02 : f32
    %42 = vector.broadcast %cst_15 : f32 to vector<16x1xf32>
    %43 = arith.mulf %41, %42 : vector<16x1xf32>
    %44 = arith.mulf %39, %39 : vector<16x128xf32>
    %cst_16 = arith.constant dense<0.000000e+00> : vector<16xf32>
    %45 = vector.multi_reduction <add>, %44, %cst_16 [1] : vector<16x128xf32> to vector<16xf32>
    %46 = vector.shape_cast %45 : vector<16xf32> to vector<16x1xf32>
    %cst_17 = arith.constant 3.125000e-02 : f32
    %47 = vector.broadcast %cst_17 : f32 to vector<16x1xf32>
    %48 = arith.mulf %46, %47 : vector<16x1xf32>
    %49 = arith.mulf %43, %43 : vector<16x1xf32>
    %50 = arith.subf %48, %49 : vector<16x1xf32>
    %51 = vector.broadcast %43 : vector<16x1xf32> to vector<16x128xf32>
    %52 = arith.subf %39, %51 : vector<16x128xf32>
    %cst_18 = arith.constant 9.99999974E-6 : f32
    %53 = vector.broadcast %cst_18 : f32 to vector<16x1xf32>
    %54 = arith.addf %50, %53 : vector<16x1xf32>
    %55 = math.rsqrt %54 : vector<16x1xf32>
    %56 = vector.broadcast %55 : vector<16x1xf32> to vector<16x128xf32>
    %57 = arith.mulf %52, %56 : vector<16x128xf32>
    %c0_19 = arith.constant 0 : index
    %c0_20 = arith.constant 0 : index
    %58 = vector.load %arg5[%c0_19, %c0_20] : memref<1x128xf32, #tpu.memory_space<vmem>>, vector<1x128xf32>
    %59 = vector.broadcast %58 : vector<1x128xf32> to vector<16x128xf32>
    %60 = arith.mulf %57, %59 : vector<16x128xf32>
    %c0_21 = arith.constant 0 : index
    %c0_22 = arith.constant 0 : index
    %61 = vector.load %arg6[%c0_21, %c0_22] : memref<1x128xf32, #tpu.memory_space<vmem>>, vector<1x128xf32>
    %62 = vector.broadcast %61 : vector<1x128xf32> to vector<16x128xf32>
    %63 = arith.addf %60, %62 : vector<16x128xf32>
    %c0_23 = arith.constant 0 : index
    %c0_24 = arith.constant 0 : index
    %64 = vector.load %arg7[%c0_23, %c0_24] : memref<16x128xf32, #tpu.memory_space<vmem>>, vector<16x128xf32>
    tpu.vector_store %arg7[%c0_23, %c0_24], %63 {strides = array<i32>} : memref<16x128xf32, #tpu.memory_space<vmem>>, vector<16x128xf32>,
    return
  }
}

</mosaic_0001>

<llo_original>
// kernel: joint_embedding_forward.1
$region0: #{joint_embedding_forward.1}
  #allocation0 [shape = 'u32[]', space=smem, size = 0x4, offset = 0x4, fixed_abs, tag = 'smem constant byte address 0x4 - core index']
  #allocation1 [shape = 'u32[144,128]{1,0:T(1,128)}', space=vmem, size = 0x12000, scoped, tag = 'internal scratch']
  %s0 = inlined_call_operand.vmem [shape: s32[16,1], index: 0, kind: input, shape index: {}]
  %s1 = inlined_call_operand.vmem [shape: s32[16,1], index: 1, kind: input, shape index: {}]
  %s2 = inlined_call_operand.vmem [shape: f32[100,128], index: 2, kind: input, shape index: {}]
  %s3 = inlined_call_operand.vmem [shape: f32[100,128], index: 3, kind: input, shape index: {}]
  %s4 = inlined_call_operand.vmem [shape: f32[8,128], index: 4, kind: input, shape index: {}]
  %s5 = inlined_call_operand.vmem [shape: f32[1,128], index: 5, kind: input, shape index: {}]
  %s6 = inlined_call_operand.vmem [shape: f32[1,128], index: 6, kind: input, shape index: {}]
  %s7 = inlined_call_operand.vmem [shape: f32[16,128], index: 7, kind: output, shape index: {}]
  %s8 = sld [smem:[#allocation0]]
  $region38: #{joint_embedding_forward.1} parent=0
    _
  %s10 = ssub.s32 1, %s8
  %s11 = scalar_select 0, %s10, %s8
  // Predicated region
  $region2: #{joint_embedding_forward.1} parent=0 // pred_check
    _
  $region3: #{joint_embedding_forward.1} parent=0 // pred_check_branch
    %13 = sbr.rel (0) target = $region5
  $region4: #{joint_embedding_forward.1} parent=0 // pred_region
    _
  $region5: #{joint_embedding_forward.1} parent=0 // pred_fallthru
    _
  // Predicated region
  $region6: #{joint_embedding_forward.1} parent=0 // pred_check
    _
  $region7: #{joint_embedding_forward.1} parent=0 // pred_check_branch
    %15 = sbr.rel (0) target = $region9
  $region8: #{joint_embedding_forward.1} parent=0 // pred_region
    _
  $region9: #{joint_embedding_forward.1} parent=0 // pred_fallthru
    _
  // Predicated region
  $region10: #{joint_embedding_forward.1} parent=0 // pred_check
    _
  $region11: #{joint_embedding_forward.1} parent=0 // pred_check_branch
    %17 = sbr.rel (0) target = $region13
  $region12: #{joint_embedding_forward.1} parent=0 // pred_region
    _
  $region13: #{joint_embedding_forward.1} parent=0 // pred_fallthru
    _
  // Predicated region
  $region14: #{joint_embedding_forward.1} parent=0 // pred_check
    _
  $region15: #{joint_embedding_forward.1} parent=0 // pred_check_branch
    %19 = sbr.rel (0) target = $region17
  $region16: #{joint_embedding_forward.1} parent=0 // pred_region
    _
  $region17: #{joint_embedding_forward.1} parent=0 // pred_fallthru
    _
  // Predicated region
  $region18: #{joint_embedding_forward.1} parent=0 // pred_check
    _
  $region19: #{joint_embedding_forward.1} parent=0 // pred_check_branch
    %21 = sbr.rel (0) target = $region21
  $region20: #{joint_embedding_forward.1} parent=0 // pred_region
    _
  $region21: #{joint_embedding_forward.1} parent=0 // pred_fallthru
    _
  // Predicated region
  $region22: #{joint_embedding_forward.1} parent=0 // pred_check
    _
  $region23: #{joint_embedding_forward.1} parent=0 // pred_check_branch
    %23 = sbr.rel (0) target = $region25
  $region24: #{joint_embedding_forward.1} parent=0 // pred_region
    _
  $region25: #{joint_embedding_forward.1} parent=0 // pred_fallthru
    _
  // Predicated region
  $region26: #{joint_embedding_forward.1} parent=0 // pred_check
    _
  $region27: #{joint_embedding_forward.1} parent=0 // pred_check_branch
    %25 = sbr.rel (0) target = $region29
  $region28: #{joint_embedding_forward.1} parent=0 // pred_region
    _
  $region29: #{joint_embedding_forward.1} parent=0 // pred_fallthru
    _
  %v26 = vld [vmem:[%s0] sm:$0xff]
  %v27 = vld [vmem:[%s0 + $0x8] sm:$0xff]
  %v28 = vld [vmem:[%s1] sm:$0xff]
  %v29 = vld [vmem:[%s1 + $0x8] sm:$0xff]
  %v30 = vlaneseq
  %v31 = vand.u32 %v30, 127
  %32 = vset.pattern.permute.xlu0 0
  %33 = vperm.xlu0 %32, %v26
  %v34 = vpop.permute.xlu0 %33
  %35 = vset.pattern.permute.xlu0 0
  %36 = vperm.xlu0 %35, %v27
  %v37 = vpop.permute.xlu0 %36
  %vm38 = vcmp.eq.s32.totalorder %v31, %v34
  %vm39 = vcmp.eq.s32.totalorder %v31, %v37
  %v40 = vsel %vm38, 1, 0
  %v41 = vsel %vm39, 1, 0
  %v42 = vcvt.s32.f32 %v40
  %v43 = vcvt.s32.f32 %v41
  %44 = vset.pattern.permute.xlu0 0
  %45 = vperm.xlu0 %44, %v28
  %v46 = vpop.permute.xlu0 %45
  %47 = vset.pattern.permute.xlu0 0
  %48 = vperm.xlu0 %47, %v29
  %v49 = vpop.permute.xlu0 %48
  %vm50 = vcmp.eq.s32.totalorder %v31, %v46
  %vm51 = vcmp.eq.s32.totalorder %v31, %v49
  %v52 = vsel %vm50, 1, 0
  %v53 = vsel %vm51, 1, 0
  %v54 = vcvt.s32.f32 %v52
  %v55 = vcvt.s32.f32 %v53
  %v56 = vlaneseq
  %v57 = vshrl.u32 %v56, 7
  %v58 = vadd.s32 %v57, 8
  %vm59 = vcmp.lt.s32.totalorder %v57, 0
  %v60 = vsub.s32 0, %v57
  %v61 = vsel %vm59, %v60, %v57
  %v62 = vshrl.u32 %v61, 3
  %v63 = vand.u32 %v61, 7
  %v64 = vsub.s32 0, %v63
  %v65 = vsel %vm59, %v64, %v63
  %vm66 = vcmp.lt.s32.totalorder %v58, 0
  %v67 = vsub.s32 0, %v58
  %v68 = vsel %vm66, %v67, %v58
  %v69 = vshrl.u32 %v68, 3
  %v70 = vand.u32 %v68, 7
  %v71 = vsub.s32 0, %v70
  %v72 = vsel %vm66, %v71, %v70
  %vm73 = vcmp.ne.s32.totalorder %v65, 0
  %vm74 = vcmp.ne.s32.totalorder %v72, 0
  %vm75 = vcmp.lt.s32.totalorder %v65, 0
  %vm76 = vcmp.lt.s32.totalorder %v72, 0
  %vm77 = vmand %vm75, %vm73
  %vm78 = vmand %vm76, %vm74
  %v79 = vadd.s32 %v65, 8
  %v80 = vadd.s32 %v72, 8
  %v81 = vsel %vm77, %v79, %v65
  %v82 = vsel %vm78, %v80, %v72
  %vm83 = vcmp.eq.s32.totalorder %v81, %v31
  %vm84 = vcmp.eq.s32.totalorder %v82, %v31
  %v85 = vsel %vm83, 1, 0
  %v86 = vsel %vm84, 1, 0
  %v87 = vcvt.s32.f32 %v85
  %v88 = vcvt.s32.f32 %v86
  %v89 = vld [vmem:[%s2] sm:$0xff]
  %v90 = vld [vmem:[%s2 + $0x8] sm:$0xff]
  %v91 = vld [vmem:[%s2 + $0x10] sm:$0xff]
  %v92 = vld [vmem:[%s2 + $0x18] sm:$0xff]
  %v93 = vld [vmem:[%s2 + $0x20] sm:$0xff]
  %v94 = vld [vmem:[%s2 + $0x28] sm:$0xff]
  %v95 = vld [vmem:[%s2 + $0x30] sm:$0xff]
  %v96 = vld [vmem:[%s2 + $0x38] sm:$0xff]
  %v97 = vld [vmem:[%s2 + $0x40] sm:$0xff]
  %v98 = vld [vmem:[%s2 + $0x48] sm:$0xff]
  %v99 = vld [vmem:[%s2 + $0x50] sm:$0xff]
  %v100 = vld [vmem:[%s2 + $0x58] sm:$0xff]
  %v101 = vld [vmem:[%s2 + $0x60] sm:$0xf]
  %v102 = vld [vmem:[%s3] sm:$0xff]
  %v103 = vld [vmem:[%s3 + $0x8] sm:$0xff]
  %v104 = vld [vmem:[%s3 + $0x10] sm:$0xff]
  %v105 = vld [vmem:[%s3 + $0x18] sm:$0xff]
  %v106 = vld [vmem:[%s3 + $0x20] sm:$0xff]
  %v107 = vld [vmem:[%s3 + $0x28] sm:$0xff]
  %v108 = vld [vmem:[%s3 + $0x30] sm:$0xff]
  %v109 = vld [vmem:[%s3 + $0x38] sm:$0xff]
  %v110 = vld [vmem:[%s3 + $0x40] sm:$0xff]
  %v111 = vld [vmem:[%s3 + $0x48] sm:$0xff]
  %v112 = vld [vmem:[%s3 + $0x50] sm:$0xff]
  %v113 = vld [vmem:[%s3 + $0x58] sm:$0xff]
  %v114 = vld [vmem:[%s3 + $0x60] sm:$0xf]
  %vm115 = vcmask 818176
  %v117 = vsel %vm115, %v54, 0
  %v120 = vsel %vm115, %v55, 0
  %vm122 = vcmask 1043456
  %v124 = vsel %vm122, %v114, 0
  %126 = vmatprep.subr.mxu0 0.0
  %127 = vmatpush1.msra.mxu0 0.0
  %128 = vmatprep.subr.mxu0 0.0
  %129 = vmatpush1.msra.mxu0 0.0
  %130 = vmatprep.subr.mxu0 0.0
  %131 = vmatpush1.msra.mxu0 0.0
  %132 = vmatprep.subr.mxu0 0.0
  %133 = vmatpush1.msra.mxu0 %v124
  %134 = vmatprep.subr.mxu0 0.0
  %135 = vmatpush1.msra.mxu0 %v113
  %136 = vmatprep.subr.mxu0 0.0
  %137 = vmatpush1.msra.mxu0 %v112
  %138 = vmatprep.subr.mxu0 0.0
  %139 = vmatpush1.msra.mxu0 %v111
  %140 = vmatprep.subr.mxu0 0.0
  %141 = vmatpush1.msra.mxu0 %v110
  %142 = vmatprep.subr.mxu0 0.0
  %143 = vmatpush1.msra.mxu0 %v109
  %144 = vmatprep.subr.mxu0 0.0
  %145 = vmatpush1.msra.mxu0 %v108
  %146 = vmatprep.subr.mxu0 0.0
  %147 = vmatpush1.msra.mxu0 %v107
  %148 = vmatprep.subr.mxu0 0.0
  %149 = vmatpush1.msra.mxu0 %v106
  %150 = vmatprep.subr.mxu0 0.0
  %151 = vmatpush1.msra.mxu0 %v105
  %152 = vmatprep.subr.mxu0 0.0
  %153 = vmatpush1.msra.mxu0 %v104
  %154 = vmatprep.subr.mxu0 0.0
  %155 = vmatpush1.msra.mxu0 %v103
  %156 = vmatprep.subr.mxu0 0.0
  %157 = vmatpush1.msra.mxu0 %v102
  %158 = vmatprep.subr.mxu0 0.0
  %159 = vmatpush2.msra.mxu0 0.0
  %160 = vmatprep.subr.mxu0 0.0
  %161 = vmatpush2.msra.mxu0 0.0
  %162 = vmatprep.subr.mxu0 0.0
  %163 = vmatpush2.msra.mxu0 0.0
  %164 = vmatprep.subr.mxu0 0.0
  %165 = vmatpush2.msra.mxu0 0.0
  %166 = vmatprep.subr.mxu0 0.0
  %167 = vmatpush2.msra.mxu0 0.0
  %168 = vmatprep.subr.mxu0 0.0
  %169 = vmatpush2.msra.mxu0 0.0
  %170 = vmatprep.subr.mxu0 0.0
  %171 = vmatpush2.msra.mxu0 0.0
  %172 = vmatprep.subr.mxu0 0.0
  %173 = vmatpush2.msra.mxu0 0.0
  %174 = vmatprep.subr.mxu0 0.0
  %175 = vmatpush2.msra.mxu0 0.0
  %176 = vmatprep.subr.mxu0 0.0
  %177 = vmatpush2.msra.mxu0 0.0
  %178 = vmatprep.subr.mxu0 0.0
  %179 = vmatpush2.msra.mxu0 0.0
  %180 = vmatprep.subr.mxu0 0.0
  %181 = vmatpush2.msra.mxu0 0.0
  %182 = vmatprep.subr.mxu0 0.0
  %183 = vmatpush2.msra.mxu0 0.0
  %184 = vmatprep.subr.mxu0 0.0
  %185 = vmatpush2.msra.mxu0 0.0
  %186 = vmatprep.subr.mxu0 0.0
  %187 = vmatpush2.msra.mxu0 0.0
  %188 = vmatprep.subr.mxu0 0.0
  %189 = vmatpush2.msra.mxu0 0.0
  %190 = vmatprep.mubr.f32.mxu0 0.0
  %191 = vmatmul.mubr.f32.gmra.mxu0 %v117
  %v192 = vpop.f32.mrf.mxu0
  %v193 = vadd.f32 0.0, %v192
  %v194 = vpop.f32.mrf.mxu0
  %195 = vmatprep.mubr.f32.mxu0 0.0
  %196 = vmatmul.mubr.f32.gmra.mxu0 %v120
  %v197 = vpop.f32.mrf.mxu0
  %v198 = vadd.f32 0.0, %v197
  %v199 = vpop.f32.mrf.mxu0
  %200 = vdwg.mxu0
  %v202 = vsel %vm115, %v42, 0
  %v205 = vsel %vm115, %v43, 0
  %v208 = vsel %vm122, %v101, 0
  %210 = vmatprep.subr.mxu0 0.0
  %211 = vmatpush1.msra.mxu0 0.0
  %212 = vmatprep.subr.mxu0 0.0
  %213 = vmatpush1.msra.mxu0 0.0
  %214 = vmatprep.subr.mxu0 0.0
  %215 = vmatpush1.msra.mxu0 0.0
  %216 = vmatprep.subr.mxu0 0.0
  %217 = vmatpush1.msra.mxu0 %v208
  %218 = vmatprep.subr.mxu0 0.0
  %219 = vmatpush1.msra.mxu0 %v100
  %220 = vmatprep.subr.mxu0 0.0
  %221 = vmatpush1.msra.mxu0 %v99
  %222 = vmatprep.subr.mxu0 0.0
  %223 = vmatpush1.msra.mxu0 %v98
  %224 = vmatprep.subr.mxu0 0.0
  %225 = vmatpush1.msra.mxu0 %v97
  %226 = vmatprep.subr.mxu0 0.0
  %227 = vmatpush1.msra.mxu0 %v96
  %228 = vmatprep.subr.mxu0 0.0
  %229 = vmatpush1.msra.mxu0 %v95
  %230 = vmatprep.subr.mxu0 0.0
  %231 = vmatpush1.msra.mxu0 %v94
  %232 = vmatprep.subr.mxu0 0.0
  %233 = vmatpush1.msra.mxu0 %v93
  %234 = vmatprep.subr.mxu0 0.0
  %235 = vmatpush1.msra.mxu0 %v92
  %236 = vmatprep.subr.mxu0 0.0
  %237 = vmatpush1.msra.mxu0 %v91
  %238 = vmatprep.subr.mxu0 0.0
  %239 = vmatpush1.msra.mxu0 %v90
  %240 = vmatprep.subr.mxu0 0.0
  %241 = vmatpush1.msra.mxu0 %v89
  %242 = vmatprep.subr.mxu0 0.0
  %243 = vmatpush2.msra.mxu0 0.0
  %244 = vmatprep.subr.mxu0 0.0
  %245 = vmatpush2.msra.mxu0 0.0
  %246 = vmatprep.subr.mxu0 0.0
  %247 = vmatpush2.msra.mxu0 0.0
  %248 = vmatprep.subr.mxu0 0.0
  %249 = vmatpush2.msra.mxu0 0.0
  %250 = vmatprep.subr.mxu0 0.0
  %251 = vmatpush2.msra.mxu0 0.0
  %252 = vmatprep.subr.mxu0 0.0
  %253 = vmatpush2.msra.mxu0 0.0
  %254 = vmatprep.subr.mxu0 0.0
  %255 = vmatpush2.msra.mxu0 0.0
  %256 = vmatprep.subr.mxu0 0.0
  %257 = vmatpush2.msra.mxu0 0.0
  %258 = vmatprep.subr.mxu0 0.0
  %259 = vmatpush2.msra.mxu0 0.0
  %260 = vmatprep.subr.mxu0 0.0
  %261 = vmatpush2.msra.mxu0 0.0
  %262 = vmatprep.subr.mxu0 0.0
  %263 = vmatpush2.msra.mxu0 0.0
  %264 = vmatprep.subr.mxu0 0.0
  %265 = vmatpush2.msra.mxu0 0.0
  %266 = vmatprep.subr.mxu0 0.0
  %267 = vmatpush2.msra.mxu0 0.0
  %268 = vmatprep.subr.mxu0 0.0
  %269 = vmatpush2.msra.mxu0 0.0
  %270 = vmatprep.subr.mxu0 0.0
  %271 = vmatpush2.msra.mxu0 0.0
  %272 = vmatprep.subr.mxu0 0.0
  %273 = vmatpush2.msra.mxu0 0.0
  %274 = vmatprep.mubr.f32.mxu0 0.0
  %275 = vmatmul.mubr.f32.gmra.mxu0 %v202
  %v276 = vpop.f32.mrf.mxu0
  %v277 = vadd.f32 %v193, %v276
  %v278 = vpop.f32.mrf.mxu0
  %279 = vmatprep.mubr.f32.mxu0 0.0
  %280 = vmatmul.mubr.f32.gmra.mxu0 %v205
  %v281 = vpop.f32.mrf.mxu0
  %v282 = vadd.f32 %v198, %v281
  %v283 = vpop.f32.mrf.mxu0
  %284 = vdwg.mxu0
  %v285 = vld [vmem:[%s4] sm:$0xff]
  %vm286 = vcmask 64512
  %v288 = vsel %vm286, %v87, 0
  %v291 = vsel %vm286, %v88, 0
  %293 = vmatprep.subr.mxu0 0.0
  %294 = vmatpush1.msra.mxu0 0.0
  %295 = vmatprep.subr.mxu0 0.0
  %296 = vmatpush1.msra.mxu0 0.0
  %297 = vmatprep.subr.mxu0 0.0
  %298 = vmatpush1.msra.mxu0 0.0
  %299 = vmatprep.subr.mxu0 0.0
  %300 = vmatpush1.msra.mxu0 0.0
  %301 = vmatprep.subr.mxu0 0.0
  %302 = vmatpush1.msra.mxu0 0.0
  %303 = vmatprep.subr.mxu0 0.0
  %304 = vmatpush1.msra.mxu0 0.0
  %305 = vmatprep.subr.mxu0 0.0
  %306 = vmatpush1.msra.mxu0 0.0
  %307 = vmatprep.subr.mxu0 0.0
  %308 = vmatpush1.msra.mxu0 0.0
  %309 = vmatprep.subr.mxu0 0.0
  %310 = vmatpush1.msra.mxu0 0.0
  %311 = vmatprep.subr.mxu0 0.0
  %312 = vmatpush1.msra.mxu0 0.0
  %313 = vmatprep.subr.mxu0 0.0
  %314 = vmatpush1.msra.mxu0 0.0
  %315 = vmatprep.subr.mxu0 0.0
  %316 = vmatpush1.msra.mxu0 0.0
  %317 = vmatprep.subr.mxu0 0.0
  %318 = vmatpush1.msra.mxu0 0.0
  %319 = vmatprep.subr.mxu0 0.0
  %320 = vmatpush1.msra.mxu0 0.0
  %321 = vmatprep.subr.mxu0 0.0
  %322 = vmatpush1.msra.mxu0 0.0
  %323 = vmatprep.subr.mxu0 0.0
  %324 = vmatpush1.msra.mxu0 %v285
  %325 = vmatprep.subr.mxu0 0.0
  %326 = vmatpush2.msra.mxu0 0.0
  %327 = vmatprep.subr.mxu0 0.0
  %328 = vmatpush2.msra.mxu0 0.0
  %329 = vmatprep.subr.mxu0 0.0
  %330 = vmatpush2.msra.mxu0 0.0
  %331 = vmatprep.subr.mxu0 0.0
  %332 = vmatpush2.msra.mxu0 0.0
  %333 = vmatprep.subr.mxu0 0.0
  %334 = vmatpush2.msra.mxu0 0.0
  %335 = vmatprep.subr.mxu0 0.0
  %336 = vmatpush2.msra.mxu0 0.0
  %337 = vmatprep.subr.mxu0 0.0
  %338 = vmatpush2.msra.mxu0 0.0
  %339 = vmatprep.subr.mxu0 0.0
  %340 = vmatpush2.msra.mxu0 0.0
  %341 = vmatprep.subr.mxu0 0.0
  %342 = vmatpush2.msra.mxu0 0.0
  %343 = vmatprep.subr.mxu0 0.0
  %344 = vmatpush2.msra.mxu0 0.0
  %345 = vmatprep.subr.mxu0 0.0
  %346 = vmatpush2.msra.mxu0 0.0
  %347 = vmatprep.subr.mxu0 0.0
  %348 = vmatpush2.msra.mxu0 0.0
  %349 = vmatprep.subr.mxu0 0.0
  %350 = vmatpush2.msra.mxu0 0.0
  %351 = vmatprep.subr.mxu0 0.0
  %352 = vmatpush2.msra.mxu0 0.0
  %353 = vmatprep.subr.mxu0 0.0
  %354 = vmatpush2.msra.mxu0 0.0
  %355 = vmatprep.subr.mxu0 0.0
  %356 = vmatpush2.msra.mxu0 0.0
  %357 = vmatprep.mubr.f32.mxu0 0.0
  %358 = vmatmul.mubr.f32.gmra.mxu0 %v288
  %v359 = vpop.f32.mrf.mxu0
  %v360 = vadd.f32 0.0, %v359
  %v361 = vpop.f32.mrf.mxu0
  %362 = vmatprep.mubr.f32.mxu0 0.0
  %363 = vmatmul.mubr.f32.gmra.mxu0 %v291
  %v364 = vpop.f32.mrf.mxu0
  %v365 = vadd.f32 0.0, %v364
  %v366 = vpop.f32.mrf.mxu0
  %367 = vdwg.mxu0
  %v368 = vadd.f32 %v277, %v360
  %v369 = vadd.f32 %v282, %v365
  %370 = vadd.xlane.f32.xlu0 %v368
  %v371 = vpop.xlane.xlu0 %370
  %372 = vadd.xlane.f32.xlu0 %v369
  %v373 = vpop.xlane.xlu0 %372
  %v374 = vmul.f32 %v371, 0.03125
  %v375 = vmul.f32 %v373, 0.03125
  %v376 = vmul.f32 %v368, %v368
  %v377 = vmul.f32 %v369, %v369
  %378 = vadd.xlane.f32.xlu0 %v376
  %v379 = vpop.xlane.xlu0 %378
  %380 = vadd.xlane.f32.xlu0 %v377
  %v381 = vpop.xlane.xlu0 %380
  %v382 = vmul.f32 %v379, 0.03125
  %v383 = vmul.f32 %v381, 0.03125
  %v384 = vmul.f32 %v374, %v374
  %v385 = vmul.f32 %v375, %v375
  %v386 = vsub.f32 %v382, %v384
  %v387 = vsub.f32 %v383, %v385
  %v388 = vsub.f32 %v368, %v374
  %v389 = vsub.f32 %v369, %v375
  %v390 = vadd.f32 %v386, 1e-05
  %v391 = vadd.f32 %v387, 1e-05
  %v392 = vrsqrt.pop %v390
  %v393 = vrsqrt.pop %v391
  %v394 = vmul.f32 %v388, %v392
  %v395 = vmul.f32 %v389, %v393
  %v396 = vld [vmem:[%s5] sm:$0x1]
  %v398 = vlaneseq
  %v399 = vshrl.u32 %v398, 7
  %v400 = vsub.s32 0, %v399
  %v401 = vrot.slane %v396, %v400
  %v403 = vmul.f32 %v394, %v401
  %v404 = vmul.f32 %v395, %v401
  %v405 = vld [vmem:[%s6] sm:$0x1]
  %v407 = vlaneseq
  %v408 = vshrl.u32 %v407, 7
  %v409 = vsub.s32 0, %v408
  %v410 = vrot.slane %v405, %v409
  %v412 = vadd.f32 %v403, %v410
  %v413 = vadd.f32 %v404, %v410
  %414 = vst [vmem:[%s7] sm:$0xff] %v412
  %415 = vst [vmem:[%s7 + $0x8] sm:$0xff] %v413
  // Predicated region
  $region30: #{joint_embedding_forward.1} parent=0 // pred_check
    _
  $region31: #{joint_embedding_forward.1} parent=0 // pred_check_branch
    %417 = sbr.rel (0) target = $region33
  $region32: #{joint_embedding_forward.1} parent=0 // pred_region
    _
  $region33: #{joint_embedding_forward.1} parent=0 // pred_fallthru
    _
  // Predicated region
  $region34: #{joint_embedding_forward.1} parent=0 // pred_check
    _
  $region35: #{joint_embedding_forward.1} parent=0 // pred_check_branch
    %419 = sbr.rel (0) target = $region37
  $region36: #{joint_embedding_forward.1} parent=0 // pred_region
    _
  $region37: #{joint_embedding_forward.1} parent=0 // pred_fallthru
    _

</llo_original>
